<compile_context>
chip_gen: v7x
topology: tpu7x:2x2x1
jax: 0.10.0
libtpu: 0.0.40
codegen_flags: <defaults>
</compile_context>

<pallas_src>
import jax
import jax.numpy as jnp
from jax.experimental import pallas as pl
from jax.experimental.pallas import tpu as pltpu


def _round_up(x, m):
    return ((x + m - 1) // m) * m


def _gj_kernel(spe_ref, sym_ref, rho_ref, w_ref, b_ref, out_ref):
    # spe_ref: (S,) int32 in SMEM (scalar prefetch)
    # sym_ref: (tm, 1) int32      rho_ref: (tm, O) f32
    # w_ref:   (O, S*nmax) bf16   b_ref:   (1, S*nmax) f32
    # out_ref: (tm, nmax) f32
    S = spe_ref.shape[0]
    nmax = out_ref.shape[-1]

    # Single packed matmul for all species; bf16 MXU fast path, f32 accumulate.
    rho = rho_ref[...].astype(jnp.bfloat16)
    y_all = jnp.dot(rho, w_ref[...],
                    preferred_element_type=jnp.float32) + b_ref[...]  # (tm, S*nmax)

    sym = sym_ref[...]                                   # (tm, 1), read once
    acc = jnp.zeros(out_ref.shape, jnp.float32)
    for s in range(S):                                   # small static loop
        mask = sym == spe_ref[s]                         # (tm, 1) broadcast
        acc = jnp.where(mask, y_all[:, s * nmax:(s + 1) * nmax], acc)  # overwrite

    out_ref[...] = acc.astype(out_ref.dtype)             # single store per tile


def gj_pack_params(weights, biases):
    """One-time ('model init') packing of per-species Linear params.

    weights: (S, O, nmax) f32, biases: (S, nmax) f32
    -> w_cat: (O, S*nmax) bf16, b_cat: (1, S*nmax) f32
    """
    S, O, nmax = weights.shape
    w_cat = jnp.transpose(weights, (1, 0, 2)).reshape(O, S * nmax)
    b_cat = biases.reshape(1, S * nmax).astype(jnp.float32)
    return w_cat.astype(jnp.bfloat16), b_cat


def _choose_tm(NTA, max_tm, min_grid=2):
    NTA8 = _round_up(max(NTA, 1), 8)
    tm = min(max_tm, NTA8)
    # Give the single 'parallel' axis at least `min_grid` steps when the
    # problem is big enough to split (keeps both v7x TensorCores busy).
    if NTA8 >= min_grid * 128 and pl.cdiv(NTA8, tm) < min_grid:
        tm = _round_up(pl.cdiv(NTA8, min_grid), 8)
    return tm


def gj_forward(rho, symbols, species_ids, w_cat, b_cat, nmax, *, max_tm=1024):
    """rho: (NTA, O) f32; symbols: (NTA,) i32; species_ids: (S,) i32;
    w_cat: (O, S*nmax) bf16; b_cat: (1, S*nmax) f32  ->  (NTA, nmax) f32."""
    NTA, O = rho.shape
    S = int(species_ids.shape[0])
    assert w_cat.shape == (O, S * nmax) and b_cat.shape == (1, S * nmax)

    tm = _choose_tm(NTA, max_tm)
    grid = (pl.cdiv(NTA, tm),)

    sym_col = symbols.astype(jnp.int32).reshape(NTA, 1)   # metadata-only reshape

    grid_spec = pltpu.PrefetchScalarGridSpec(
        num_scalar_prefetch=1,                             # species_ids -> SMEM
        grid=grid,
        in_specs=[
            pl.BlockSpec((tm, 1), lambda i, spe: (i, 0)),            # symbols tile
            pl.BlockSpec((tm, O), lambda i, spe: (i, 0)),            # rho tile (unpadded)
            pl.BlockSpec((O, S * nmax), lambda i, spe: (0, 0)),      # packed W (resident)
            pl.BlockSpec((1, S * nmax), lambda i, spe: (0, 0)),      # packed b (resident)
        ],
        out_specs=pl.BlockSpec((tm, nmax), lambda i, spe: (i, 0)),   # real lane width
    )

    return pl.pallas_call(
        _gj_kernel,
        out_shape=jax.ShapeDtypeStruct((NTA, nmax), rho.dtype),
        grid_spec=grid_spec,
        compiler_params=pltpu.CompilerParams(
            dimension_semantics=("parallel",)),
    )(species_ids.astype(jnp.int32), sym_col, rho, w_cat, b_cat)


def gj_reference(rho, symbols, species_ids, weights, biases):
    """Pure-JAX f32 reference of the PyTorch forward."""
    NTA = rho.shape[0]
    nmax = weights.shape[-1]
    coeff = jnp.zeros((NTA, nmax), dtype=rho.dtype)
    for k in range(species_ids.shape[0]):
        y = rho @ weights[k] + biases[k]
        m = (symbols == species_ids[k])[:, None]
        coeff = jnp.where(m, y, coeff)
    return coeff


if __name__ == "__main__":
    # Small, module-consistent shapes.
    NTA, O, nmax = 192, 16, 8
    species = jnp.array([1, 6, 8], dtype=jnp.int32)   # e.g. H, C, O atomic numbers
    S = int(species.shape[0])

    key = jax.random.PRNGKey(0)
    k_rho, k_sym, k_w, k_b = jax.random.split(key, 4)

    rho = jax.random.normal(k_rho, (NTA, O), dtype=jnp.float32)
    symbols = species[jax.random.randint(k_sym, (NTA,), 0, S)]

    # Per-species Linear(O -> nmax) parameters.
    weights = 0.1 * jax.random.normal(k_w, (S, O, nmax), dtype=jnp.float32)
    biases = 0.1 * jax.random.normal(k_b, (S, nmax), dtype=jnp.float32)

    # One-time packing (stands in for model init; not per-call work).
    w_cat, b_cat = gj_pack_params(weights, biases)

    # Default adaptive tile (single tile here) and a forced multi-step grid.
    out1 = jax.block_until_ready(gj_forward(rho, symbols, species, w_cat, b_cat, nmax))
    out2 = jax.block_until_ready(
        gj_forward(rho, symbols, species, w_cat, b_cat, nmax, max_tm=64))

    ref = gj_reference(rho, symbols, species, weights, biases)
    assert out1.shape == ref.shape and out2.shape == ref.shape
    # bf16 weights / in-kernel bf16 cast of rho with f32 accumulation:
    # loosened tolerance vs. the f32 reference.
    err1 = float(jnp.max(jnp.abs(out1 - ref)))
    err2 = float(jnp.max(jnp.abs(out2 - ref)))
    assert err1 < 5e-2, f"mismatch vs reference (single-tile), max err {err1}"
    assert err2 < 5e-2, f"mismatch vs reference (multi-tile), max err {err2}"

    print("KERNEL_OK")
</pallas_src>

<mosaic_0001>
module attributes {stable_mosaic.version = 11 : i64} {
  func.func @_gj_kernel(%arg0: i32, %arg1: memref<3xi32, #tpu.memory_space<smem>>, %arg2: memref<192x1xi32, #tpu.memory_space<vmem>>, %arg3: memref<192x16xf32, #tpu.memory_space<vmem>>, %arg4: memref<16x24xbf16, #tpu.memory_space<vmem>>, %arg5: memref<1x24xf32, #tpu.memory_space<vmem>>, %arg6: memref<192x8xf32, #tpu.memory_space<vmem>>) attributes {dimension_semantics = [#tpu.dimension_semantics<parallel>], iteration_bounds = array<i64: 1>, scalar_prefetch = 1 : i64, scratch_operands = 0 : i64, tpu.core_type = #tpu.core_type<tc>, window_params = [{transform_indices = @transform_0, window_bounds = array<i64: 192, 1>}, {transform_indices = @transform_1, window_bounds = array<i64: 192, 16>}, {pipeline_mode = #tpu.pipeline_mode<synchronous>, transform_indices = @transform_2, window_bounds = array<i64: 16, 24>}, {pipeline_mode = #tpu.pipeline_mode<synchronous>, transform_indices = @transform_3, window_bounds = array<i64: 1, 24>}, {transform_indices = @transform_4, window_bounds = array<i64: 192, 8>}]} {
    %c0 = arith.constant 0 : index
    %c0_0 = arith.constant 0 : index
    %0 = vector.load %arg3[%c0, %c0_0] : memref<192x16xf32, #tpu.memory_space<vmem>>, vector<192x16xf32>
    %1 = arith.truncf %0 : vector<192x16xf32> to vector<192x16xbf16>
    %c0_1 = arith.constant 0 : index
    %c0_2 = arith.constant 0 : index
    %2 = vector.load %arg4[%c0_1, %c0_2] : memref<16x24xbf16, #tpu.memory_space<vmem>>, vector<16x24xbf16>
    %cst = arith.constant dense<0.000000e+00> : vector<192x24xf32>
    %3 = tpu.matmul %1, %2, %cst {dimension_numbers = #tpu.dot_dimension_numbers<[1], [0], [0], [1], [0, 0, 1, 1], [], []>} : vector<192x16xbf16>, vector<16x24xbf16>, vector<192x24xf32> -> vector<192x24xf32>
    %c0_3 = arith.constant 0 : index
    %c0_4 = arith.constant 0 : index
    %4 = vector.load %arg5[%c0_3, %c0_4] : memref<1x24xf32, #tpu.memory_space<vmem>>, vector<1x24xf32>
    %5 = vector.broadcast %4 : vector<1x24xf32> to vector<192x24xf32>
    %6 = arith.addf %3, %5 : vector<192x24xf32>
    %c0_5 = arith.constant 0 : index
    %c0_6 = arith.constant 0 : index
    %7 = vector.load %arg2[%c0_5, %c0_6] : memref<192x1xi32, #tpu.memory_space<vmem>>, vector<192x1xi32>
    %cst_7 = arith.constant 0.000000e+00 : f32
    %8 = vector.broadcast %cst_7 : f32 to vector<192x8xf32>
    %c0_8 = arith.constant 0 : index
    %9 = memref.load %arg1[%c0_8] : memref<3xi32, #tpu.memory_space<smem>>
    %10 = vector.broadcast %9 : i32 to vector<192x1xi32>
    %11 = arith.cmpi eq, %7, %10 : vector<192x1xi32>
    %12 = vector.extract_strided_slice %6 {offsets = [0, 0], sizes = [192, 8], strides = [1, 1]} : vector<192x24xf32> to vector<192x8xf32>
    %13 = vector.shape_cast %11 : vector<192x1xi1> to vector<192x1xi1>
    %14 = vector.broadcast %13 : vector<192x1xi1> to vector<192x8xi1>
    %15 = arith.select %14, %12, %8 : vector<192x8xi1>, vector<192x8xf32>
    %c1 = arith.constant 1 : index
    %16 = memref.load %arg1[%c1] : memref<3xi32, #tpu.memory_space<smem>>
    %17 = vector.broadcast %16 : i32 to vector<192x1xi32>
    %18 = arith.cmpi eq, %7, %17 : vector<192x1xi32>
    %19 = vector.extract_strided_slice %6 {offsets = [0, 8], sizes = [192, 8], strides = [1, 1]} : vector<192x24xf32> to vector<192x8xf32>
    %20 = vector.shape_cast %18 : vector<192x1xi1> to vector<192x1xi1>
    %21 = vector.broadcast %20 : vector<192x1xi1> to vector<192x8xi1>
    %22 = arith.select %21, %19, %15 : vector<192x8xi1>, vector<192x8xf32>
    %c2 = arith.constant 2 : index
    %23 = memref.load %arg1[%c2] : memref<3xi32, #tpu.memory_space<smem>>
    %24 = vector.broadcast %23 : i32 to vector<192x1xi32>
    %25 = arith.cmpi eq, %7, %24 : vector<192x1xi32>
    %26 = vector.extract_strided_slice %6 {offsets = [0, 16], sizes = [192, 8], strides = [1, 1]} : vector<192x24xf32> to vector<192x8xf32>
    %27 = vector.shape_cast %25 : vector<192x1xi1> to vector<192x1xi1>
    %28 = vector.broadcast %27 : vector<192x1xi1> to vector<192x8xi1>
    %29 = arith.select %28, %26, %22 : vector<192x8xi1>, vector<192x8xf32>
    %c0_9 = arith.constant 0 : index
    %c0_10 = arith.constant 0 : index
    %30 = vector.load %arg6[%c0_9, %c0_10] : memref<192x8xf32, #tpu.memory_space<vmem>>, vector<192x8xf32>
    tpu.vector_store %arg6[%c0_9, %c0_10], %29 {strides = array<i32>} : memref<192x8xf32, #tpu.memory_space<vmem>>, vector<192x8xf32>,
    return
  }
  func.func @transform_0(%arg0: i32, %arg1: memref<3xi32, #tpu.memory_space<smem>>) -> (i32, i32) {
    %c0_i32 = arith.constant 0 : i32
    %c0_i32_0 = arith.constant 0 : i32
    return %arg0, %c0_i32 : i32, i32
  }
  func.func @transform_1(%arg0: i32, %arg1: memref<3xi32, #tpu.memory_space<smem>>) -> (i32, i32) {
    %c0_i32 = arith.constant 0 : i32
    %c0_i32_0 = arith.constant 0 : i32
    return %arg0, %c0_i32 : i32, i32
  }
  func.func @transform_2(%arg0: i32, %arg1: memref<3xi32, #tpu.memory_space<smem>>) -> (i32, i32) {
    %c0_i32 = arith.constant 0 : i32
    %c0_i32_0 = arith.constant 0 : i32
    %c0_i32_1 = arith.constant 0 : i32
    return %c0_i32, %c0_i32_0 : i32, i32
  }
  func.func @transform_3(%arg0: i32, %arg1: memref<3xi32, #tpu.memory_space<smem>>) -> (i32, i32) {
    %c0_i32 = arith.constant 0 : i32
    %c0_i32_0 = arith.constant 0 : i32
    %c0_i32_1 = arith.constant 0 : i32
    return %c0_i32, %c0_i32_0 : i32, i32
  }
  func.func @transform_4(%arg0: i32, %arg1: memref<3xi32, #tpu.memory_space<smem>>) -> (i32, i32) {
    %c0_i32 = arith.constant 0 : i32
    %c0_i32_0 = arith.constant 0 : i32
    return %arg0, %c0_i32 : i32, i32
  }
}

</mosaic_0001>

<llo_original>
// kernel: tpu_custom_call.1
$region0: #{tpu_custom_call.1}
  #allocation0 [shape = 'u32[]', space=smem, size = 0x4, offset = 0x4, fixed_abs, tag = 'smem constant byte address 0x4 - core index']
  #allocation1 [shape = 'u32[144,128]{1,0:T(1,128)}', space=vmem, size = 0x12000, scoped, tag = 'internal scratch']
  #allocation2 [shape = 's32[1]{0}', space=sflag, size = 0x4, scoped, tag = 'scoped memory for tpu_custom_call.1']
  #allocation3 [shape = 'u8[512]{0}', space=smem, size = 0x200, scoped, tag = 'prefetched SMEM operand 0']
  %s0 = inlined_call_operand.vmem [shape: s32[3], index: 0, kind: input, shape index: {}]
  %s1 = inlined_call_operand.vmem [shape: s32[192,1], index: 1, kind: input, shape index: {}]
  %s2 = inlined_call_operand.vmem [shape: f32[192,16], index: 2, kind: input, shape index: {}]
  %s3 = inlined_call_operand.vmem [shape: bf16[16,24], index: 3, kind: input, shape index: {}]
  %s4 = inlined_call_operand.vmem [shape: f32[1,24], index: 4, kind: input, shape index: {}]
  %s5 = inlined_call_operand.vmem [shape: f32[192,8], index: 5, kind: output, shape index: {}]
  %s6 = sld [smem:[#allocation0]]
  $region26: #{tpu_custom_call.1} parent=0
    _
  %s8 = ssub.s32 1, %s6
  %s9 = scalar_select 0, %s8, %s6
  %s10 = sshll.u32 %s0, 4
  %s11 = int_to_ptr.vmem [resolvable:$true] %s10
  %13 = dma.vmem_to_smem %s11, 16, [#allocation3], [#allocation2]
  %14 = dma.done [#allocation2], 16
  %15 = sfence
  // Predicated region
  $region2: #{tpu_custom_call.1} parent=0 // pred_check
    _
  $region3: #{tpu_custom_call.1} parent=0 // pred_check_branch
    %17 = sbr.rel (0) target = $region5
  $region4: #{tpu_custom_call.1} parent=0 // pred_region
    _
  $region5: #{tpu_custom_call.1} parent=0 // pred_fallthru
    _
  // Predicated region
  $region6: #{tpu_custom_call.1} parent=0 // pred_check
    _
  $region7: #{tpu_custom_call.1} parent=0 // pred_check_branch
    %19 = sbr.rel (0) target = $region9
  $region8: #{tpu_custom_call.1} parent=0 // pred_region
    _
  $region9: #{tpu_custom_call.1} parent=0 // pred_fallthru
    _
  // Predicated region
  $region10: #{tpu_custom_call.1} parent=0 // pred_check
    _
  $region11: #{tpu_custom_call.1} parent=0 // pred_check_branch
    %21 = sbr.rel (0) target = $region13
  $region12: #{tpu_custom_call.1} parent=0 // pred_region
    _
  $region13: #{tpu_custom_call.1} parent=0 // pred_fallthru
    _
  // Predicated region
  $region14: #{tpu_custom_call.1} parent=0 // pred_check
    _
  $region15: #{tpu_custom_call.1} parent=0 // pred_check_branch
    %23 = sbr.rel (0) target = $region17
  $region16: #{tpu_custom_call.1} parent=0 // pred_region
    _
  $region17: #{tpu_custom_call.1} parent=0 // pred_fallthru
    _
  %v25 = vld [vmem:[%s2] sm:$0xff]
  %v26 = vld [vmem:[%s2 + $0x8] sm:$0xff]
  %v27 = vld [vmem:[%s2 + $0x10] sm:$0xff]
  %v28 = vld [vmem:[%s2 + $0x18] sm:$0xff]
  %v29 = vld [vmem:[%s2 + $0x20] sm:$0xff]
  %v30 = vld [vmem:[%s2 + $0x28] sm:$0xff]
  %v31 = vld [vmem:[%s2 + $0x30] sm:$0xff]
  %v32 = vld [vmem:[%s2 + $0x38] sm:$0xff]
  %v33 = vld [vmem:[%s2 + $0x40] sm:$0xff]
  %v34 = vld [vmem:[%s2 + $0x48] sm:$0xff]
  %v35 = vld [vmem:[%s2 + $0x50] sm:$0xff]
  %v36 = vld [vmem:[%s2 + $0x58] sm:$0xff]
  %v37 = vld [vmem:[%s2 + $0x60] sm:$0xff]
  %v38 = vld [vmem:[%s2 + $0x68] sm:$0xff]
  %v39 = vld [vmem:[%s2 + $0x70] sm:$0xff]
  %v40 = vld [vmem:[%s2 + $0x78] sm:$0xff]
  %v41 = vld [vmem:[%s2 + $0x80] sm:$0xff]
  %v42 = vld [vmem:[%s2 + $0x88] sm:$0xff]
  %v43 = vld [vmem:[%s2 + $0x90] sm:$0xff]
  %v44 = vld [vmem:[%s2 + $0x98] sm:$0xff]
  %v45 = vld [vmem:[%s2 + $0xa0] sm:$0xff]
  %v46 = vld [vmem:[%s2 + $0xa8] sm:$0xff]
  %v47 = vld [vmem:[%s2 + $0xb0] sm:$0xff]
  %v48 = vld [vmem:[%s2 + $0xb8] sm:$0xff]
  %v49 = vpack.c.bf16 %v26, %v25
  %v50 = vpack.c.bf16 %v28, %v27
  %v51 = vpack.c.bf16 %v30, %v29
  %v52 = vpack.c.bf16 %v32, %v31
  %v53 = vpack.c.bf16 %v34, %v33
  %v54 = vpack.c.bf16 %v36, %v35
  %v55 = vpack.c.bf16 %v38, %v37
  %v56 = vpack.c.bf16 %v40, %v39
  %v57 = vpack.c.bf16 %v42, %v41
  %v58 = vpack.c.bf16 %v44, %v43
  %v59 = vpack.c.bf16 %v46, %v45
  %v60 = vpack.c.bf16 %v48, %v47
  %v61 = vld [vmem:[%s3] sm:$0xf]
  %v62 = vld [vmem:[%s3 + $0x4] sm:$0xf]
  %v63 = vld [vmem:[%s4] sm:$0x1]
  %v65 = vlaneseq
  %v66 = vshrl.u32 %v65, 7
  %v67 = vsub.s32 0, %v66
  %v68 = vrot.slane %v63, %v67
  %v72 = vunpack.c.l.b16 %v61
  %v73 = vunpack.c.l.b16 %v62
  %v74 = vpack.c.b16 %v73, %v72
  %vm76 = vcmask 130048
  %v78 = vsel %vm76, %v49, 0
  %v81 = vsel %vm76, %v50, 0
  %v84 = vsel %vm76, %v51, 0
  %v87 = vsel %vm76, %v52, 0
  %v90 = vsel %vm76, %v53, 0
  %v93 = vsel %vm76, %v54, 0
  %v96 = vsel %vm76, %v55, 0
  %v99 = vsel %vm76, %v56, 0
  %v102 = vsel %vm76, %v57, 0
  %v105 = vsel %vm76, %v58, 0
  %v108 = vsel %vm76, %v59, 0
  %v111 = vsel %vm76, %v60, 0
  %113 = vmatprep.subr.bf16.mxu0 0
  %114 = vmatpush1.bf16.msra.mxu0 %v74
  %115 = vmatprep.subr.bf16.mxu0 0
  %116 = vmatpush1.bf16.msra.mxu0 0
  %117 = vmatprep.subr.bf16.mxu0 0
  %118 = vmatpush1.bf16.msra.mxu0 0
  %119 = vmatprep.subr.bf16.mxu0 0
  %120 = vmatpush1.bf16.msra.mxu0 0
  %121 = vmatprep.subr.bf16.mxu0 0
  %122 = vmatpush1.bf16.msra.mxu0 0
  %123 = vmatprep.subr.bf16.mxu0 0
  %124 = vmatpush1.bf16.msra.mxu0 0
  %125 = vmatprep.subr.bf16.mxu0 0
  %126 = vmatpush1.bf16.msra.mxu0 0
  %127 = vmatprep.subr.bf16.mxu0 0
  %128 = vmatpush1.bf16.msra.mxu0 0
  %129 = vmatprep.subr.bf16.mxu0 0
  %130 = vmatpush1.bf16.msra.mxu0 0
  %131 = vmatprep.subr.bf16.mxu0 0
  %132 = vmatpush1.bf16.msra.mxu0 0
  %133 = vmatprep.subr.bf16.mxu0 0
  %134 = vmatpush1.bf16.msra.mxu0 0
  %135 = vmatprep.subr.bf16.mxu0 0
  %136 = vmatpush1.bf16.msra.mxu0 0
  %137 = vmatprep.subr.bf16.mxu0 0
  %138 = vmatpush1.bf16.msra.mxu0 0
  %139 = vmatprep.subr.bf16.mxu0 0
  %140 = vmatpush1.bf16.msra.mxu0 0
  %141 = vmatprep.subr.bf16.mxu0 0
  %142 = vmatpush1.bf16.msra.mxu0 0
  %143 = vmatprep.subr.bf16.mxu0 0
  %144 = vmatpush1.bf16.msra.mxu0 0
  %145 = vmatprep.mubr.bf16.mxu0 0
  %146 = vmatmul.mubr.bf16.gmra.mrb[0].mxu0 %v78
  %v147 = vpop.f32.mrb[0].mxu0
  %v148 = vadd.f32 %v68, %v147
  %v149 = vpop.f32.mrb[0].mxu0
  %v150 = vpop.f32.mrb[0].mxu0
  %v151 = vadd.f32 %v68, %v150
  %v152 = vpop.f32.mrb[0].mxu0
  %153 = vmatprep.mubr.bf16.mxu0 0
  %154 = vmatmul.mubr.bf16.gmra.mrb[0].mxu0 %v81
  %v155 = vpop.f32.mrb[0].mxu0
  %v156 = vadd.f32 %v68, %v155
  %v157 = vpop.f32.mrb[0].mxu0
  %v158 = vpop.f32.mrb[0].mxu0
  %v159 = vadd.f32 %v68, %v158
  %v160 = vpop.f32.mrb[0].mxu0
  %161 = vmatprep.mubr.bf16.mxu0 0
  %162 = vmatmul.mubr.bf16.gmra.mrb[0].mxu0 %v84
  %v163 = vpop.f32.mrb[0].mxu0
  %v164 = vadd.f32 %v68, %v163
  %v165 = vpop.f32.mrb[0].mxu0
  %v166 = vpop.f32.mrb[0].mxu0
  %v167 = vadd.f32 %v68, %v166
  %v168 = vpop.f32.mrb[0].mxu0
  %169 = vmatprep.mubr.bf16.mxu0 0
  %170 = vmatmul.mubr.bf16.gmra.mrb[0].mxu0 %v87
  %v171 = vpop.f32.mrb[0].mxu0
  %v172 = vadd.f32 %v68, %v171
  %v173 = vpop.f32.mrb[0].mxu0
  %v174 = vpop.f32.mrb[0].mxu0
  %v175 = vadd.f32 %v68, %v174
  %v176 = vpop.f32.mrb[0].mxu0
  %177 = vmatprep.mubr.bf16.mxu0 0
  %178 = vmatmul.mubr.bf16.gmra.mrb[0].mxu0 %v90
  %v179 = vpop.f32.mrb[0].mxu0
  %v180 = vadd.f32 %v68, %v179
  %v181 = vpop.f32.mrb[0].mxu0
  %v182 = vpop.f32.mrb[0].mxu0
  %v183 = vadd.f32 %v68, %v182
  %v184 = vpop.f32.mrb[0].mxu0
  %185 = vmatprep.mubr.bf16.mxu0 0
  %186 = vmatmul.mubr.bf16.gmra.mrb[0].mxu0 %v93
  %v187 = vpop.f32.mrb[0].mxu0
  %v188 = vadd.f32 %v68, %v187
  %v189 = vpop.f32.mrb[0].mxu0
  %v190 = vpop.f32.mrb[0].mxu0
  %v191 = vadd.f32 %v68, %v190
  %v192 = vpop.f32.mrb[0].mxu0
  %193 = vmatprep.mubr.bf16.mxu0 0
  %194 = vmatmul.mubr.bf16.gmra.mrb[0].mxu0 %v96
  %v195 = vpop.f32.mrb[0].mxu0
  %v196 = vadd.f32 %v68, %v195
  %v197 = vpop.f32.mrb[0].mxu0
  %v198 = vpop.f32.mrb[0].mxu0
  %v199 = vadd.f32 %v68, %v198
  %v200 = vpop.f32.mrb[0].mxu0
  %201 = vmatprep.mubr.bf16.mxu0 0
  %202 = vmatmul.mubr.bf16.gmra.mrb[0].mxu0 %v99
  %v203 = vpop.f32.mrb[0].mxu0
  %v204 = vadd.f32 %v68, %v203
  %v205 = vpop.f32.mrb[0].mxu0
  %v206 = vpop.f32.mrb[0].mxu0
  %v207 = vadd.f32 %v68, %v206
  %v208 = vpop.f32.mrb[0].mxu0
  %209 = vmatprep.mubr.bf16.mxu0 0
  %210 = vmatmul.mubr.bf16.gmra.mrb[0].mxu0 %v102
  %v211 = vpop.f32.mrb[0].mxu0
  %v212 = vadd.f32 %v68, %v211
  %v213 = vpop.f32.mrb[0].mxu0
  %v214 = vpop.f32.mrb[0].mxu0
  %v215 = vadd.f32 %v68, %v214
  %v216 = vpop.f32.mrb[0].mxu0
  %217 = vmatprep.mubr.bf16.mxu0 0
  %218 = vmatmul.mubr.bf16.gmra.mrb[0].mxu0 %v105
  %v219 = vpop.f32.mrb[0].mxu0
  %v220 = vadd.f32 %v68, %v219
  %v221 = vpop.f32.mrb[0].mxu0
  %v222 = vpop.f32.mrb[0].mxu0
  %v223 = vadd.f32 %v68, %v222
  %v224 = vpop.f32.mrb[0].mxu0
  %225 = vmatprep.mubr.bf16.mxu0 0
  %226 = vmatmul.mubr.bf16.gmra.mrb[0].mxu0 %v108
  %v227 = vpop.f32.mrb[0].mxu0
  %v228 = vadd.f32 %v68, %v227
  %v229 = vpop.f32.mrb[0].mxu0
  %v230 = vpop.f32.mrb[0].mxu0
  %v231 = vadd.f32 %v68, %v230
  %v232 = vpop.f32.mrb[0].mxu0
  %233 = vmatprep.mubr.bf16.mxu0 0
  %234 = vmatmul.mubr.bf16.gmra.mrb[0].mxu0 %v111
  %v235 = vpop.f32.mrb[0].mxu0
  %v236 = vadd.f32 %v68, %v235
  %v237 = vpop.f32.mrb[0].mxu0
  %v238 = vpop.f32.mrb[0].mxu0
  %v239 = vadd.f32 %v68, %v238
  %v240 = vpop.f32.mrb[0].mxu0
  %241 = vdwg.mxu0
  %v242 = vld [vmem:[%s1] sm:$0xff]
  %v243 = vld [vmem:[%s1 + $0x8] sm:$0xff]
  %v244 = vld [vmem:[%s1 + $0x10] sm:$0xff]
  %v245 = vld [vmem:[%s1 + $0x18] sm:$0xff]
  %v246 = vld [vmem:[%s1 + $0x20] sm:$0xff]
  %v247 = vld [vmem:[%s1 + $0x28] sm:$0xff]
  %v248 = vld [vmem:[%s1 + $0x30] sm:$0xff]
  %v249 = vld [vmem:[%s1 + $0x38] sm:$0xff]
  %v250 = vld [vmem:[%s1 + $0x40] sm:$0xff]
  %v251 = vld [vmem:[%s1 + $0x48] sm:$0xff]
  %v252 = vld [vmem:[%s1 + $0x50] sm:$0xff]
  %v253 = vld [vmem:[%s1 + $0x58] sm:$0xff]
  %v254 = vld [vmem:[%s1 + $0x60] sm:$0xff]
  %v255 = vld [vmem:[%s1 + $0x68] sm:$0xff]
  %v256 = vld [vmem:[%s1 + $0x70] sm:$0xff]
  %v257 = vld [vmem:[%s1 + $0x78] sm:$0xff]
  %v258 = vld [vmem:[%s1 + $0x80] sm:$0xff]
  %v259 = vld [vmem:[%s1 + $0x88] sm:$0xff]
  %v260 = vld [vmem:[%s1 + $0x90] sm:$0xff]
  %v261 = vld [vmem:[%s1 + $0x98] sm:$0xff]
  %v262 = vld [vmem:[%s1 + $0xa0] sm:$0xff]
  %v263 = vld [vmem:[%s1 + $0xa8] sm:$0xff]
  %v264 = vld [vmem:[%s1 + $0xb0] sm:$0xff]
  %v265 = vld [vmem:[%s1 + $0xb8] sm:$0xff]
  %s266 = sld [smem:[#allocation3]]
  %v267 = vstv %s266
  %vm268 = vcmp.eq.s32.totalorder %v242, %v267
  %vm269 = vcmp.eq.s32.totalorder %v243, %v267
  %vm270 = vcmp.eq.s32.totalorder %v244, %v267
  %vm271 = vcmp.eq.s32.totalorder %v245, %v267
  %vm272 = vcmp.eq.s32.totalorder %v246, %v267
  %vm273 = vcmp.eq.s32.totalorder %v247, %v267
  %vm274 = vcmp.eq.s32.totalorder %v248, %v267
  %vm275 = vcmp.eq.s32.totalorder %v249, %v267
  %vm276 = vcmp.eq.s32.totalorder %v250, %v267
  %vm277 = vcmp.eq.s32.totalorder %v251, %v267
  %vm278 = vcmp.eq.s32.totalorder %v252, %v267
  %vm279 = vcmp.eq.s32.totalorder %v253, %v267
  %vm280 = vcmp.eq.s32.totalorder %v254, %v267
  %vm281 = vcmp.eq.s32.totalorder %v255, %v267
  %vm282 = vcmp.eq.s32.totalorder %v256, %v267
  %vm283 = vcmp.eq.s32.totalorder %v257, %v267
  %vm284 = vcmp.eq.s32.totalorder %v258, %v267
  %vm285 = vcmp.eq.s32.totalorder %v259, %v267
  %vm286 = vcmp.eq.s32.totalorder %v260, %v267
  %vm287 = vcmp.eq.s32.totalorder %v261, %v267
  %vm288 = vcmp.eq.s32.totalorder %v262, %v267
  %vm289 = vcmp.eq.s32.totalorder %v263, %v267
  %vm290 = vcmp.eq.s32.totalorder %v264, %v267
  %vm291 = vcmp.eq.s32.totalorder %v265, %v267
  %v292 = vsel %vm268, 1, 0
  %v293 = vsel %vm269, 1, 0
  %v294 = vsel %vm270, 1, 0
  %v295 = vsel %vm271, 1, 0
  %v296 = vsel %vm272, 1, 0
  %v297 = vsel %vm273, 1, 0
  %v298 = vsel %vm274, 1, 0
  %v299 = vsel %vm275, 1, 0
  %v300 = vsel %vm276, 1, 0
  %v301 = vsel %vm277, 1, 0
  %v302 = vsel %vm278, 1, 0
  %v303 = vsel %vm279, 1, 0
  %v304 = vsel %vm280, 1, 0
  %v305 = vsel %vm281, 1, 0
  %v306 = vsel %vm282, 1, 0
  %v307 = vsel %vm283, 1, 0
  %v308 = vsel %vm284, 1, 0
  %v309 = vsel %vm285, 1, 0
  %v310 = vsel %vm286, 1, 0
  %v311 = vsel %vm287, 1, 0
  %v312 = vsel %vm288, 1, 0
  %v313 = vsel %vm289, 1, 0
  %v314 = vsel %vm290, 1, 0
  %v315 = vsel %vm291, 1, 0
  %316 = vset.pattern.permute.xlu0 0
  %317 = vperm.xlu0 %316, %v292
  %v318 = vpop.permute.xlu0 %317
  %319 = vset.pattern.permute.xlu0 0
  %320 = vperm.xlu0 %319, %v293
  %v321 = vpop.permute.xlu0 %320
  %322 = vset.pattern.permute.xlu0 0
  %323 = vperm.xlu0 %322, %v294
  %v324 = vpop.permute.xlu0 %323
  %325 = vset.pattern.permute.xlu0 0
  %326 = vperm.xlu0 %325, %v295
  %v327 = vpop.permute.xlu0 %326
  %328 = vset.pattern.permute.xlu0 0
  %329 = vperm.xlu0 %328, %v296
  %v330 = vpop.permute.xlu0 %329
  %331 = vset.pattern.permute.xlu0 0
  %332 = vperm.xlu0 %331, %v297
  %v333 = vpop.permute.xlu0 %332
  %334 = vset.pattern.permute.xlu0 0
  %335 = vperm.xlu0 %334, %v298
  %v336 = vpop.permute.xlu0 %335
  %337 = vset.pattern.permute.xlu0 0
  %338 = vperm.xlu0 %337, %v299
  %v339 = vpop.permute.xlu0 %338
  %340 = vset.pattern.permute.xlu0 0
  %341 = vperm.xlu0 %340, %v300
  %v342 = vpop.permute.xlu0 %341
  %343 = vset.pattern.permute.xlu0 0
  %344 = vperm.xlu0 %343, %v301
  %v345 = vpop.permute.xlu0 %344
  %346 = vset.pattern.permute.xlu0 0
  %347 = vperm.xlu0 %346, %v302
  %v348 = vpop.permute.xlu0 %347
  %349 = vset.pattern.permute.xlu0 0
  %350 = vperm.xlu0 %349, %v303
  %v351 = vpop.permute.xlu0 %350
  %352 = vset.pattern.permute.xlu0 0
  %353 = vperm.xlu0 %352, %v304
  %v354 = vpop.permute.xlu0 %353
  %355 = vset.pattern.permute.xlu0 0
  %356 = vperm.xlu0 %355, %v305
  %v357 = vpop.permute.xlu0 %356
  %358 = vset.pattern.permute.xlu0 0
  %359 = vperm.xlu0 %358, %v306
  %v360 = vpop.permute.xlu0 %359
  %361 = vset.pattern.permute.xlu0 0
  %362 = vperm.xlu0 %361, %v307
  %v363 = vpop.permute.xlu0 %362
  %364 = vset.pattern.permute.xlu0 0
  %365 = vperm.xlu0 %364, %v308
  %v366 = vpop.permute.xlu0 %365
  %367 = vset.pattern.permute.xlu0 0
  %368 = vperm.xlu0 %367, %v309
  %v369 = vpop.permute.xlu0 %368
  %370 = vset.pattern.permute.xlu0 0
  %371 = vperm.xlu0 %370, %v310
  %v372 = vpop.permute.xlu0 %371
  %373 = vset.pattern.permute.xlu0 0
  %374 = vperm.xlu0 %373, %v311
  %v375 = vpop.permute.xlu0 %374
  %376 = vset.pattern.permute.xlu0 0
  %377 = vperm.xlu0 %376, %v312
  %v378 = vpop.permute.xlu0 %377
  %379 = vset.pattern.permute.xlu0 0
  %380 = vperm.xlu0 %379, %v313
  %v381 = vpop.permute.xlu0 %380
  %382 = vset.pattern.permute.xlu0 0
  %383 = vperm.xlu0 %382, %v314
  %v384 = vpop.permute.xlu0 %383
  %385 = vset.pattern.permute.xlu0 0
  %386 = vperm.xlu0 %385, %v315
  %v387 = vpop.permute.xlu0 %386
  %vm388 = vcmp.eq.s32.totalorder %v318, 1
  %vm389 = vcmp.eq.s32.totalorder %v321, 1
  %vm390 = vcmp.eq.s32.totalorder %v324, 1
  %vm391 = vcmp.eq.s32.totalorder %v327, 1
  %vm392 = vcmp.eq.s32.totalorder %v330, 1
  %vm393 = vcmp.eq.s32.totalorder %v333, 1
  %vm394 = vcmp.eq.s32.totalorder %v336, 1
  %vm395 = vcmp.eq.s32.totalorder %v339, 1
  %vm396 = vcmp.eq.s32.totalorder %v342, 1
  %vm397 = vcmp.eq.s32.totalorder %v345, 1
  %vm398 = vcmp.eq.s32.totalorder %v348, 1
  %vm399 = vcmp.eq.s32.totalorder %v351, 1
  %vm400 = vcmp.eq.s32.totalorder %v354, 1
  %vm401 = vcmp.eq.s32.totalorder %v357, 1
  %vm402 = vcmp.eq.s32.totalorder %v360, 1
  %vm403 = vcmp.eq.s32.totalorder %v363, 1
  %vm404 = vcmp.eq.s32.totalorder %v366, 1
  %vm405 = vcmp.eq.s32.totalorder %v369, 1
  %vm406 = vcmp.eq.s32.totalorder %v372, 1
  %vm407 = vcmp.eq.s32.totalorder %v375, 1
  %vm408 = vcmp.eq.s32.totalorder %v378, 1
  %vm409 = vcmp.eq.s32.totalorder %v381, 1
  %vm410 = vcmp.eq.s32.totalorder %v384, 1
  %vm411 = vcmp.eq.s32.totalorder %v387, 1
  %v412 = vsel %vm388, %v148, 0.0
  %v413 = vsel %vm389, %v151, 0.0
  %v414 = vsel %vm390, %v156, 0.0
  %v415 = vsel %vm391, %v159, 0.0
  %v416 = vsel %vm392, %v164, 0.0
  %v417 = vsel %vm393, %v167, 0.0
  %v418 = vsel %vm394, %v172, 0.0
  %v419 = vsel %vm395, %v175, 0.0
  %v420 = vsel %vm396, %v180, 0.0
  %v421 = vsel %vm397, %v183, 0.0
  %v422 = vsel %vm398, %v188, 0.0
  %v423 = vsel %vm399, %v191, 0.0
  %v424 = vsel %vm400, %v196, 0.0
  %v425 = vsel %vm401, %v199, 0.0
  %v426 = vsel %vm402, %v204, 0.0
  %v427 = vsel %vm403, %v207, 0.0
  %v428 = vsel %vm404, %v212, 0.0
  %v429 = vsel %vm405, %v215, 0.0
  %v430 = vsel %vm406, %v220, 0.0
  %v431 = vsel %vm407, %v223, 0.0
  %v432 = vsel %vm408, %v228, 0.0
  %v433 = vsel %vm409, %v231, 0.0
  %v434 = vsel %vm410, %v236, 0.0
  %v435 = vsel %vm411, %v239, 0.0
  %s436 = sld [smem:[#allocation3 + $0x1]]
  %v437 = vstv %s436
  %vm438 = vcmp.eq.s32.totalorder %v242, %v437
  %vm439 = vcmp.eq.s32.totalorder %v243, %v437
  %vm440 = vcmp.eq.s32.totalorder %v244, %v437
  %vm441 = vcmp.eq.s32.totalorder %v245, %v437
  %vm442 = vcmp.eq.s32.totalorder %v246, %v437
  %vm443 = vcmp.eq.s32.totalorder %v247, %v437
  %vm444 = vcmp.eq.s32.totalorder %v248, %v437
  %vm445 = vcmp.eq.s32.totalorder %v249, %v437
  %vm446 = vcmp.eq.s32.totalorder %v250, %v437
  %vm447 = vcmp.eq.s32.totalorder %v251, %v437
  %vm448 = vcmp.eq.s32.totalorder %v252, %v437
  %vm449 = vcmp.eq.s32.totalorder %v253, %v437
  %vm450 = vcmp.eq.s32.totalorder %v254, %v437
  %vm451 = vcmp.eq.s32.totalorder %v255, %v437
  %vm452 = vcmp.eq.s32.totalorder %v256, %v437
  %vm453 = vcmp.eq.s32.totalorder %v257, %v437
  %vm454 = vcmp.eq.s32.totalorder %v258, %v437
  %vm455 = vcmp.eq.s32.totalorder %v259, %v437
  %vm456 = vcmp.eq.s32.totalorder %v260, %v437
  %vm457 = vcmp.eq.s32.totalorder %v261, %v437
  %vm458 = vcmp.eq.s32.totalorder %v262, %v437
  %vm459 = vcmp.eq.s32.totalorder %v263, %v437
  %vm460 = vcmp.eq.s32.totalorder %v264, %v437
  %vm461 = vcmp.eq.s32.totalorder %v265, %v437
  %v462 = vsel %vm438, 1, 0
  %v463 = vsel %vm439, 1, 0
  %v464 = vsel %vm440, 1, 0
  %v465 = vsel %vm441, 1, 0
  %v466 = vsel %vm442, 1, 0
  %v467 = vsel %vm443, 1, 0
  %v468 = vsel %vm444, 1, 0
  %v469 = vsel %vm445, 1, 0
  %v470 = vsel %vm446, 1, 0
  %v471 = vsel %vm447, 1, 0
  %v472 = vsel %vm448, 1, 0
  %v473 = vsel %vm449, 1, 0
  %v474 = vsel %vm450, 1, 0
  %v475 = vsel %vm451, 1, 0
  %v476 = vsel %vm452, 1, 0
  %v477 = vsel %vm453, 1, 0
  %v478 = vsel %vm454, 1, 0
  %v479 = vsel %vm455, 1, 0
  %v480 = vsel %vm456, 1, 0
  %v481 = vsel %vm457, 1, 0
  %v482 = vsel %vm458, 1, 0
  %v483 = vsel %vm459, 1, 0
  %v484 = vsel %vm460, 1, 0
  %v485 = vsel %vm461, 1, 0
  %486 = vset.pattern.permute.xlu0 0
  %487 = vperm.xlu0 %486, %v462
  %v488 = vpop.permute.xlu0 %487
  %489 = vset.pattern.permute.xlu0 0
  %490 = vperm.xlu0 %489, %v463
  %v491 = vpop.permute.xlu0 %490
  %492 = vset.pattern.permute.xlu0 0
  %493 = vperm.xlu0 %492, %v464
  %v494 = vpop.permute.xlu0 %493
  %495 = vset.pattern.permute.xlu0 0
  %496 = vperm.xlu0 %495, %v465
  %v497 = vpop.permute.xlu0 %496
  %498 = vset.pattern.permute.xlu0 0
  %499 = vperm.xlu0 %498, %v466
  %v500 = vpop.permute.xlu0 %499
  %501 = vset.pattern.permute.xlu0 0
  %502 = vperm.xlu0 %501, %v467
  %v503 = vpop.permute.xlu0 %502
  %504 = vset.pattern.permute.xlu0 0
  %505 = vperm.xlu0 %504, %v468
  %v506 = vpop.permute.xlu0 %505
  %507 = vset.pattern.permute.xlu0 0
  %508 = vperm.xlu0 %507, %v469
  %v509 = vpop.permute.xlu0 %508
  %510 = vset.pattern.permute.xlu0 0
  %511 = vperm.xlu0 %510, %v470
  %v512 = vpop.permute.xlu0 %511
  %513 = vset.pattern.permute.xlu0 0
  %514 = vperm.xlu0 %513, %v471
  %v515 = vpop.permute.xlu0 %514
  %516 = vset.pattern.permute.xlu0 0
  %517 = vperm.xlu0 %516, %v472
  %v518 = vpop.permute.xlu0 %517
  %519 = vset.pattern.permute.xlu0 0
  %520 = vperm.xlu0 %519, %v473
  %v521 = vpop.permute.xlu0 %520
  %522 = vset.pattern.permute.xlu0 0
  %523 = vperm.xlu0 %522, %v474
  %v524 = vpop.permute.xlu0 %523
  %525 = vset.pattern.permute.xlu0 0
  %526 = vperm.xlu0 %525, %v475
  %v527 = vpop.permute.xlu0 %526
  %528 = vset.pattern.permute.xlu0 0
  %529 = vperm.xlu0 %528, %v476
  %v530 = vpop.permute.xlu0 %529
  %531 = vset.pattern.permute.xlu0 0
  %532 = vperm.xlu0 %531, %v477
  %v533 = vpop.permute.xlu0 %532
  %534 = vset.pattern.permute.xlu0 0
  %535 = vperm.xlu0 %534, %v478
  %v536 = vpop.permute.xlu0 %535
  %537 = vset.pattern.permute.xlu0 0
  %538 = vperm.xlu0 %537, %v479
  %v539 = vpop.permute.xlu0 %538
  %540 = vset.pattern.permute.xlu0 0
  %541 = vperm.xlu0 %540, %v480
  %v542 = vpop.permute.xlu0 %541
  %543 = vset.pattern.permute.xlu0 0
  %544 = vperm.xlu0 %543, %v481
  %v545 = vpop.permute.xlu0 %544
  %546 = vset.pattern.permute.xlu0 0
  %547 = vperm.xlu0 %546, %v482
  %v548 = vpop.permute.xlu0 %547
  %549 = vset.pattern.permute.xlu0 0
  %550 = vperm.xlu0 %549, %v483
  %v551 = vpop.permute.xlu0 %550
  %552 = vset.pattern.permute.xlu0 0
  %553 = vperm.xlu0 %552, %v484
  %v554 = vpop.permute.xlu0 %553
  %555 = vset.pattern.permute.xlu0 0
  %556 = vperm.xlu0 %555, %v485
  %v557 = vpop.permute.xlu0 %556
  %vm558 = vcmp.eq.s32.totalorder %v488, 1
  %vm559 = vcmp.eq.s32.totalorder %v491, 1
  %vm560 = vcmp.eq.s32.totalorder %v494, 1
  %vm561 = vcmp.eq.s32.totalorder %v497, 1
  %vm562 = vcmp.eq.s32.totalorder %v500, 1
  %vm563 = vcmp.eq.s32.totalorder %v503, 1
  %vm564 = vcmp.eq.s32.totalorder %v506, 1
  %vm565 = vcmp.eq.s32.totalorder %v509, 1
  %vm566 = vcmp.eq.s32.totalorder %v512, 1
  %vm567 = vcmp.eq.s32.totalorder %v515, 1
  %vm568 = vcmp.eq.s32.totalorder %v518, 1
  %vm569 = vcmp.eq.s32.totalorder %v521, 1
  %vm570 = vcmp.eq.s32.totalorder %v524, 1
  %vm571 = vcmp.eq.s32.totalorder %v527, 1
  %vm572 = vcmp.eq.s32.totalorder %v530, 1
  %vm573 = vcmp.eq.s32.totalorder %v533, 1
  %vm574 = vcmp.eq.s32.totalorder %v536, 1
  %vm575 = vcmp.eq.s32.totalorder %v539, 1
  %vm576 = vcmp.eq.s32.totalorder %v542, 1
  %vm577 = vcmp.eq.s32.totalorder %v545, 1
  %vm578 = vcmp.eq.s32.totalorder %v548, 1
  %vm579 = vcmp.eq.s32.totalorder %v551, 1
  %vm580 = vcmp.eq.s32.totalorder %v554, 1
  %vm581 = vcmp.eq.s32.totalorder %v557, 1
  %606 = vrot.lane.b32.xlu0 %v412, 8
  %v607 = vpop.permute.xlu0 %606
  %608 = vrot.lane.b32.xlu0 %v413, 8
  %v609 = vpop.permute.xlu0 %608
  %610 = vrot.lane.b32.xlu0 %v414, 8
  %v611 = vpop.permute.xlu0 %610
  %612 = vrot.lane.b32.xlu0 %v415, 8
  %v613 = vpop.permute.xlu0 %612
  %614 = vrot.lane.b32.xlu0 %v416, 8
  %v615 = vpop.permute.xlu0 %614
  %616 = vrot.lane.b32.xlu0 %v417, 8
  %v617 = vpop.permute.xlu0 %616
  %618 = vrot.lane.b32.xlu0 %v418, 8
  %v619 = vpop.permute.xlu0 %618
  %620 = vrot.lane.b32.xlu0 %v419, 8
  %v621 = vpop.permute.xlu0 %620
  %622 = vrot.lane.b32.xlu0 %v420, 8
  %v623 = vpop.permute.xlu0 %622
  %624 = vrot.lane.b32.xlu0 %v421, 8
  %v625 = vpop.permute.xlu0 %624
  %626 = vrot.lane.b32.xlu0 %v422, 8
  %v627 = vpop.permute.xlu0 %626
  %628 = vrot.lane.b32.xlu0 %v423, 8
  %v629 = vpop.permute.xlu0 %628
  %630 = vrot.lane.b32.xlu0 %v424, 8
  %v631 = vpop.permute.xlu0 %630
  %632 = vrot.lane.b32.xlu0 %v425, 8
  %v633 = vpop.permute.xlu0 %632
  %634 = vrot.lane.b32.xlu0 %v426, 8
  %v635 = vpop.permute.xlu0 %634
  %636 = vrot.lane.b32.xlu0 %v427, 8
  %v637 = vpop.permute.xlu0 %636
  %638 = vrot.lane.b32.xlu0 %v428, 8
  %v639 = vpop.permute.xlu0 %638
  %640 = vrot.lane.b32.xlu0 %v429, 8
  %v641 = vpop.permute.xlu0 %640
  %642 = vrot.lane.b32.xlu0 %v430, 8
  %v643 = vpop.permute.xlu0 %642
  %644 = vrot.lane.b32.xlu0 %v431, 8
  %v645 = vpop.permute.xlu0 %644
  %646 = vrot.lane.b32.xlu0 %v432, 8
  %v647 = vpop.permute.xlu0 %646
  %648 = vrot.lane.b32.xlu0 %v433, 8
  %v649 = vpop.permute.xlu0 %648
  %650 = vrot.lane.b32.xlu0 %v434, 8
  %v651 = vpop.permute.xlu0 %650
  %652 = vrot.lane.b32.xlu0 %v435, 8
  %v653 = vpop.permute.xlu0 %652
  %v678 = vsel %vm558, %v148, %v607
  %v679 = vsel %vm559, %v151, %v609
  %v680 = vsel %vm560, %v156, %v611
  %v681 = vsel %vm561, %v159, %v613
  %v682 = vsel %vm562, %v164, %v615
  %v683 = vsel %vm563, %v167, %v617
  %v684 = vsel %vm564, %v172, %v619
  %v685 = vsel %vm565, %v175, %v621
  %v686 = vsel %vm566, %v180, %v623
  %v687 = vsel %vm567, %v183, %v625
  %v688 = vsel %vm568, %v188, %v627
  %v689 = vsel %vm569, %v191, %v629
  %v690 = vsel %vm570, %v196, %v631
  %v691 = vsel %vm571, %v199, %v633
  %v692 = vsel %vm572, %v204, %v635
  %v693 = vsel %vm573, %v207, %v637
  %v694 = vsel %vm574, %v212, %v639
  %v695 = vsel %vm575, %v215, %v641
  %v696 = vsel %vm576, %v220, %v643
  %v697 = vsel %vm577, %v223, %v645
  %v698 = vsel %vm578, %v228, %v647
  %v699 = vsel %vm579, %v231, %v649
  %v700 = vsel %vm580, %v236, %v651
  %v701 = vsel %vm581, %v239, %v653
  %s702 = sld [smem:[#allocation3 + $0x2]]
  %v703 = vstv %s702
  %vm704 = vcmp.eq.s32.totalorder %v242, %v703
  %vm705 = vcmp.eq.s32.totalorder %v243, %v703
  %vm706 = vcmp.eq.s32.totalorder %v244, %v703
  %vm707 = vcmp.eq.s32.totalorder %v245, %v703
  %vm708 = vcmp.eq.s32.totalorder %v246, %v703
  %vm709 = vcmp.eq.s32.totalorder %v247, %v703
  %vm710 = vcmp.eq.s32.totalorder %v248, %v703
  %vm711 = vcmp.eq.s32.totalorder %v249, %v703
  %vm712 = vcmp.eq.s32.totalorder %v250, %v703
  %vm713 = vcmp.eq.s32.totalorder %v251, %v703
  %vm714 = vcmp.eq.s32.totalorder %v252, %v703
  %vm715 = vcmp.eq.s32.totalorder %v253, %v703
  %vm716 = vcmp.eq.s32.totalorder %v254, %v703
  %vm717 = vcmp.eq.s32.totalorder %v255, %v703
  %vm718 = vcmp.eq.s32.totalorder %v256, %v703
  %vm719 = vcmp.eq.s32.totalorder %v257, %v703
  %vm720 = vcmp.eq.s32.totalorder %v258, %v703
  %vm721 = vcmp.eq.s32.totalorder %v259, %v703
  %vm722 = vcmp.eq.s32.totalorder %v260, %v703
  %vm723 = vcmp.eq.s32.totalorder %v261, %v703
  %vm724 = vcmp.eq.s32.totalorder %v262, %v703
  %vm725 = vcmp.eq.s32.totalorder %v263, %v703
  %vm726 = vcmp.eq.s32.totalorder %v264, %v703
  %vm727 = vcmp.eq.s32.totalorder %v265, %v703
  %v728 = vsel %vm704, 1, 0
  %v729 = vsel %vm705, 1, 0
  %v730 = vsel %vm706, 1, 0
  %v731 = vsel %vm707, 1, 0
  %v732 = vsel %vm708, 1, 0
  %v733 = vsel %vm709, 1, 0
  %v734 = vsel %vm710, 1, 0
  %v735 = vsel %vm711, 1, 0
  %v736 = vsel %vm712, 1, 0
  %v737 = vsel %vm713, 1, 0
  %v738 = vsel %vm714, 1, 0
  %v739 = vsel %vm715, 1, 0
  %v740 = vsel %vm716, 1, 0
  %v741 = vsel %vm717, 1, 0
  %v742 = vsel %vm718, 1, 0
  %v743 = vsel %vm719, 1, 0
  %v744 = vsel %vm720, 1, 0
  %v745 = vsel %vm721, 1, 0
  %v746 = vsel %vm722, 1, 0
  %v747 = vsel %vm723, 1, 0
  %v748 = vsel %vm724, 1, 0
  %v749 = vsel %vm725, 1, 0
  %v750 = vsel %vm726, 1, 0
  %v751 = vsel %vm727, 1, 0
  %752 = vset.pattern.permute.xlu0 0
  %753 = vperm.xlu0 %752, %v728
  %v754 = vpop.permute.xlu0 %753
  %755 = vset.pattern.permute.xlu0 0
  %756 = vperm.xlu0 %755, %v729
  %v757 = vpop.permute.xlu0 %756
  %758 = vset.pattern.permute.xlu0 0
  %759 = vperm.xlu0 %758, %v730
  %v760 = vpop.permute.xlu0 %759
  %761 = vset.pattern.permute.xlu0 0
  %762 = vperm.xlu0 %761, %v731
  %v763 = vpop.permute.xlu0 %762
  %764 = vset.pattern.permute.xlu0 0
  %765 = vperm.xlu0 %764, %v732
  %v766 = vpop.permute.xlu0 %765
  %767 = vset.pattern.permute.xlu0 0
  %768 = vperm.xlu0 %767, %v733
  %v769 = vpop.permute.xlu0 %768
  %770 = vset.pattern.permute.xlu0 0
  %771 = vperm.xlu0 %770, %v734
  %v772 = vpop.permute.xlu0 %771
  %773 = vset.pattern.permute.xlu0 0
  %774 = vperm.xlu0 %773, %v735
  %v775 = vpop.permute.xlu0 %774
  %776 = vset.pattern.permute.xlu0 0
  %777 = vperm.xlu0 %776, %v736
  %v778 = vpop.permute.xlu0 %777
  %779 = vset.pattern.permute.xlu0 0
  %780 = vperm.xlu0 %779, %v737
  %v781 = vpop.permute.xlu0 %780
  %782 = vset.pattern.permute.xlu0 0
  %783 = vperm.xlu0 %782, %v738
  %v784 = vpop.permute.xlu0 %783
  %785 = vset.pattern.permute.xlu0 0
  %786 = vperm.xlu0 %785, %v739
  %v787 = vpop.permute.xlu0 %786
  %788 = vset.pattern.permute.xlu0 0
  %789 = vperm.xlu0 %788, %v740
  %v790 = vpop.permute.xlu0 %789
  %791 = vset.pattern.permute.xlu0 0
  %792 = vperm.xlu0 %791, %v741
  %v793 = vpop.permute.xlu0 %792
  %794 = vset.pattern.permute.xlu0 0
  %795 = vperm.xlu0 %794, %v742
  %v796 = vpop.permute.xlu0 %795
  %797 = vset.pattern.permute.xlu0 0
  %798 = vperm.xlu0 %797, %v743
  %v799 = vpop.permute.xlu0 %798
  %800 = vset.pattern.permute.xlu0 0
  %801 = vperm.xlu0 %800, %v744
  %v802 = vpop.permute.xlu0 %801
  %803 = vset.pattern.permute.xlu0 0
  %804 = vperm.xlu0 %803, %v745
  %v805 = vpop.permute.xlu0 %804
  %806 = vset.pattern.permute.xlu0 0
  %807 = vperm.xlu0 %806, %v746
  %v808 = vpop.permute.xlu0 %807
  %809 = vset.pattern.permute.xlu0 0
  %810 = vperm.xlu0 %809, %v747
  %v811 = vpop.permute.xlu0 %810
  %812 = vset.pattern.permute.xlu0 0
  %813 = vperm.xlu0 %812, %v748
  %v814 = vpop.permute.xlu0 %813
  %815 = vset.pattern.permute.xlu0 0
  %816 = vperm.xlu0 %815, %v749
  %v817 = vpop.permute.xlu0 %816
  %818 = vset.pattern.permute.xlu0 0
  %819 = vperm.xlu0 %818, %v750
  %v820 = vpop.permute.xlu0 %819
  %821 = vset.pattern.permute.xlu0 0
  %822 = vperm.xlu0 %821, %v751
  %v823 = vpop.permute.xlu0 %822
  %vm824 = vcmp.eq.s32.totalorder %v754, 1
  %vm825 = vcmp.eq.s32.totalorder %v757, 1
  %vm826 = vcmp.eq.s32.totalorder %v760, 1
  %vm827 = vcmp.eq.s32.totalorder %v763, 1
  %vm828 = vcmp.eq.s32.totalorder %v766, 1
  %vm829 = vcmp.eq.s32.totalorder %v769, 1
  %vm830 = vcmp.eq.s32.totalorder %v772, 1
  %vm831 = vcmp.eq.s32.totalorder %v775, 1
  %vm832 = vcmp.eq.s32.totalorder %v778, 1
  %vm833 = vcmp.eq.s32.totalorder %v781, 1
  %vm834 = vcmp.eq.s32.totalorder %v784, 1
  %vm835 = vcmp.eq.s32.totalorder %v787, 1
  %vm836 = vcmp.eq.s32.totalorder %v790, 1
  %vm837 = vcmp.eq.s32.totalorder %v793, 1
  %vm838 = vcmp.eq.s32.totalorder %v796, 1
  %vm839 = vcmp.eq.s32.totalorder %v799, 1
  %vm840 = vcmp.eq.s32.totalorder %v802, 1
  %vm841 = vcmp.eq.s32.totalorder %v805, 1
  %vm842 = vcmp.eq.s32.totalorder %v808, 1
  %vm843 = vcmp.eq.s32.totalorder %v811, 1
  %vm844 = vcmp.eq.s32.totalorder %v814, 1
  %vm845 = vcmp.eq.s32.totalorder %v817, 1
  %vm846 = vcmp.eq.s32.totalorder %v820, 1
  %vm847 = vcmp.eq.s32.totalorder %v823, 1
  %872 = vrot.lane.b32.xlu0 %v678, 8
  %v873 = vpop.permute.xlu0 %872
  %874 = vrot.lane.b32.xlu0 %v679, 8
  %v875 = vpop.permute.xlu0 %874
  %876 = vrot.lane.b32.xlu0 %v680, 8
  %v877 = vpop.permute.xlu0 %876
  %878 = vrot.lane.b32.xlu0 %v681, 8
  %v879 = vpop.permute.xlu0 %878
  %880 = vrot.lane.b32.xlu0 %v682, 8
  %v881 = vpop.permute.xlu0 %880
  %882 = vrot.lane.b32.xlu0 %v683, 8
  %v883 = vpop.permute.xlu0 %882
  %884 = vrot.lane.b32.xlu0 %v684, 8
  %v885 = vpop.permute.xlu0 %884
  %886 = vrot.lane.b32.xlu0 %v685, 8
  %v887 = vpop.permute.xlu0 %886
  %888 = vrot.lane.b32.xlu0 %v686, 8
  %v889 = vpop.permute.xlu0 %888
  %890 = vrot.lane.b32.xlu0 %v687, 8
  %v891 = vpop.permute.xlu0 %890
  %892 = vrot.lane.b32.xlu0 %v688, 8
  %v893 = vpop.permute.xlu0 %892
  %894 = vrot.lane.b32.xlu0 %v689, 8
  %v895 = vpop.permute.xlu0 %894
  %896 = vrot.lane.b32.xlu0 %v690, 8
  %v897 = vpop.permute.xlu0 %896
  %898 = vrot.lane.b32.xlu0 %v691, 8
  %v899 = vpop.permute.xlu0 %898
  %900 = vrot.lane.b32.xlu0 %v692, 8
  %v901 = vpop.permute.xlu0 %900
  %902 = vrot.lane.b32.xlu0 %v693, 8
  %v903 = vpop.permute.xlu0 %902
  %904 = vrot.lane.b32.xlu0 %v694, 8
  %v905 = vpop.permute.xlu0 %904
  %906 = vrot.lane.b32.xlu0 %v695, 8
  %v907 = vpop.permute.xlu0 %906
  %908 = vrot.lane.b32.xlu0 %v696, 8
  %v909 = vpop.permute.xlu0 %908
  %910 = vrot.lane.b32.xlu0 %v697, 8
  %v911 = vpop.permute.xlu0 %910
  %912 = vrot.lane.b32.xlu0 %v698, 8
  %v913 = vpop.permute.xlu0 %912
  %914 = vrot.lane.b32.xlu0 %v699, 8
  %v915 = vpop.permute.xlu0 %914
  %916 = vrot.lane.b32.xlu0 %v700, 8
  %v917 = vpop.permute.xlu0 %916
  %918 = vrot.lane.b32.xlu0 %v701, 8
  %v919 = vpop.permute.xlu0 %918
  %v944 = vsel %vm824, %v148, %v873
  %v945 = vsel %vm825, %v151, %v875
  %v946 = vsel %vm826, %v156, %v877
  %v947 = vsel %vm827, %v159, %v879
  %v948 = vsel %vm828, %v164, %v881
  %v949 = vsel %vm829, %v167, %v883
  %v950 = vsel %vm830, %v172, %v885
  %v951 = vsel %vm831, %v175, %v887
  %v952 = vsel %vm832, %v180, %v889
  %v953 = vsel %vm833, %v183, %v891
  %v954 = vsel %vm834, %v188, %v893
  %v955 = vsel %vm835, %v191, %v895
  %v956 = vsel %vm836, %v196, %v897
  %v957 = vsel %vm837, %v199, %v899
  %v958 = vsel %vm838, %v204, %v901
  %v959 = vsel %vm839, %v207, %v903
  %v960 = vsel %vm840, %v212, %v905
  %v961 = vsel %vm841, %v215, %v907
  %v962 = vsel %vm842, %v220, %v909
  %v963 = vsel %vm843, %v223, %v911
  %v964 = vsel %vm844, %v228, %v913
  %v965 = vsel %vm845, %v231, %v915
  %v966 = vsel %vm846, %v236, %v917
  %v967 = vsel %vm847, %v239, %v919
  %992 = vrot.lane.b32.xlu0 %v944, 112
  %v993 = vpop.permute.xlu0 %992
  %994 = vrot.lane.b32.xlu0 %v945, 112
  %v995 = vpop.permute.xlu0 %994
  %996 = vrot.lane.b32.xlu0 %v946, 112
  %v997 = vpop.permute.xlu0 %996
  %998 = vrot.lane.b32.xlu0 %v947, 112
  %v999 = vpop.permute.xlu0 %998
  %1000 = vrot.lane.b32.xlu0 %v948, 112
  %v1001 = vpop.permute.xlu0 %1000
  %1002 = vrot.lane.b32.xlu0 %v949, 112
  %v1003 = vpop.permute.xlu0 %1002
  %1004 = vrot.lane.b32.xlu0 %v950, 112
  %v1005 = vpop.permute.xlu0 %1004
  %1006 = vrot.lane.b32.xlu0 %v951, 112
  %v1007 = vpop.permute.xlu0 %1006
  %1008 = vrot.lane.b32.xlu0 %v952, 112
  %v1009 = vpop.permute.xlu0 %1008
  %1010 = vrot.lane.b32.xlu0 %v953, 112
  %v1011 = vpop.permute.xlu0 %1010
  %1012 = vrot.lane.b32.xlu0 %v954, 112
  %v1013 = vpop.permute.xlu0 %1012
  %1014 = vrot.lane.b32.xlu0 %v955, 112
  %v1015 = vpop.permute.xlu0 %1014
  %1016 = vrot.lane.b32.xlu0 %v956, 112
  %v1017 = vpop.permute.xlu0 %1016
  %1018 = vrot.lane.b32.xlu0 %v957, 112
  %v1019 = vpop.permute.xlu0 %1018
  %1020 = vrot.lane.b32.xlu0 %v958, 112
  %v1021 = vpop.permute.xlu0 %1020
  %1022 = vrot.lane.b32.xlu0 %v959, 112
  %v1023 = vpop.permute.xlu0 %1022
  %1024 = vrot.lane.b32.xlu0 %v960, 112
  %v1025 = vpop.permute.xlu0 %1024
  %1026 = vrot.lane.b32.xlu0 %v961, 112
  %v1027 = vpop.permute.xlu0 %1026
  %1028 = vrot.lane.b32.xlu0 %v962, 112
  %v1029 = vpop.permute.xlu0 %1028
  %1030 = vrot.lane.b32.xlu0 %v963, 112
  %v1031 = vpop.permute.xlu0 %1030
  %1032 = vrot.lane.b32.xlu0 %v964, 112
  %v1033 = vpop.permute.xlu0 %1032
  %1034 = vrot.lane.b32.xlu0 %v965, 112
  %v1035 = vpop.permute.xlu0 %1034
  %1036 = vrot.lane.b32.xlu0 %v966, 112
  %v1037 = vpop.permute.xlu0 %1036
  %1038 = vrot.lane.b32.xlu0 %v967, 112
  %v1039 = vpop.permute.xlu0 %1038
  %vm1064 = vcmask 64512
  %1065 = vst.msk [vmem:[%s5] sm:$0xff] %vm1064, %v993
  %1066 = vst.msk [vmem:[%s5 + $0x8] sm:$0xff] %vm1064, %v995
  %1067 = vst.msk [vmem:[%s5 + $0x10] sm:$0xff] %vm1064, %v997
  %1068 = vst.msk [vmem:[%s5 + $0x18] sm:$0xff] %vm1064, %v999
  %1069 = vst.msk [vmem:[%s5 + $0x20] sm:$0xff] %vm1064, %v1001
  %1070 = vst.msk [vmem:[%s5 + $0x28] sm:$0xff] %vm1064, %v1003
  %1071 = vst.msk [vmem:[%s5 + $0x30] sm:$0xff] %vm1064, %v1005
  %1072 = vst.msk [vmem:[%s5 + $0x38] sm:$0xff] %vm1064, %v1007
  %1073 = vst.msk [vmem:[%s5 + $0x40] sm:$0xff] %vm1064, %v1009
  %1074 = vst.msk [vmem:[%s5 + $0x48] sm:$0xff] %vm1064, %v1011
  %1075 = vst.msk [vmem:[%s5 + $0x50] sm:$0xff] %vm1064, %v1013
  %1076 = vst.msk [vmem:[%s5 + $0x58] sm:$0xff] %vm1064, %v1015
  %1077 = vst.msk [vmem:[%s5 + $0x60] sm:$0xff] %vm1064, %v1017
  %1078 = vst.msk [vmem:[%s5 + $0x68] sm:$0xff] %vm1064, %v1019
  %1079 = vst.msk [vmem:[%s5 + $0x70] sm:$0xff] %vm1064, %v1021
  %1080 = vst.msk [vmem:[%s5 + $0x78] sm:$0xff] %vm1064, %v1023
  %1081 = vst.msk [vmem:[%s5 + $0x80] sm:$0xff] %vm1064, %v1025
  %1082 = vst.msk [vmem:[%s5 + $0x88] sm:$0xff] %vm1064, %v1027
  %1083 = vst.msk [vmem:[%s5 + $0x90] sm:$0xff] %vm1064, %v1029
  %1084 = vst.msk [vmem:[%s5 + $0x98] sm:$0xff] %vm1064, %v1031
  %1085 = vst.msk [vmem:[%s5 + $0xa0] sm:$0xff] %vm1064, %v1033
  %1086 = vst.msk [vmem:[%s5 + $0xa8] sm:$0xff] %vm1064, %v1035
  %1087 = vst.msk [vmem:[%s5 + $0xb0] sm:$0xff] %vm1064, %v1037
  %1088 = vst.msk [vmem:[%s5 + $0xb8] sm:$0xff] %vm1064, %v1039
  // Predicated region
  $region18: #{tpu_custom_call.1} parent=0 // pred_check
    _
  $region19: #{tpu_custom_call.1} parent=0 // pred_check_branch
    %1090 = sbr.rel (0) target = $region21
  $region20: #{tpu_custom_call.1} parent=0 // pred_region
    _
  $region21: #{tpu_custom_call.1} parent=0 // pred_fallthru
    _
  // Predicated region
  $region22: #{tpu_custom_call.1} parent=0 // pred_check
    _
  $region23: #{tpu_custom_call.1} parent=0 // pred_check_branch
    %1092 = sbr.rel (0) target = $region25
  $region24: #{tpu_custom_call.1} parent=0 // pred_region
    _
  $region25: #{tpu_custom_call.1} parent=0 // pred_fallthru
    _

</llo_original>
